<compile_context>
chip_gen: v7x
topology: tpu7x:2x2x1
jax: 0.10.0
libtpu: 0.0.40
codegen_flags: <defaults>
</compile_context>

<pallas_src>
import functools
import math

import jax
import jax.numpy as jnp
from jax import lax
from jax.experimental import pallas as pl
from jax.experimental.pallas import tpu as pltpu

_LANES = 128
_TARGET_BLOCK_ROWS = 2048  # 2048 x 128 f32 = 1 MiB per block


def _round_up(x, m):
    return ((x + m - 1) // m) * m


def _splitmix32(x):
    # splitmix32 / lowbias32 finalizer: cheap VPU int ops, good avalanche.
    x = x ^ (x >> 16)
    x = x * jnp.uint32(0x7FEB352D)
    x = x ^ (x >> 15)
    x = x * jnp.uint32(0x846CA68B)
    x = x ^ (x >> 16)
    return x


def _sw_random_bits(counter, seed, salt):
    return _splitmix32(counter + seed * jnp.uint32(0x9E3779B9) + salt)


def _uniform_01(bits):
    # Mantissa trick: build a float in [1, 2) and subtract 1 -> [0, 1).
    f = lax.bitcast_convert_type((bits >> 9) | jnp.uint32(0x3F800000),
                                 jnp.float32)
    return f - jnp.float32(1.0)


def _noise_kernel(seed_ref, x_ref, o_ref, *, block_rows, noise_factor,
                  use_hw_rng):
    half = block_rows // 2
    shape = (half, _LANES)

    if use_hw_rng:
        # Hardware PRNG: seed per grid step so the realization is
        # deterministic regardless of which TensorCore runs the block.
        pltpu.prng_seed(seed_ref[0], pl.program_id(0))
        bits1 = pltpu.bitcast(pltpu.prng_random_bits(shape), jnp.uint32)
        bits2 = pltpu.bitcast(pltpu.prng_random_bits(shape), jnp.uint32)
    else:
        # Portable counter-based hash PRNG (interpret / non-TPU fallback).
        seed = seed_ref[0].astype(jnp.uint32)
        pid = pl.program_id(0).astype(jnp.uint32)
        base = pid * jnp.uint32(half * _LANES)
        row = lax.broadcasted_iota(jnp.uint32, shape, 0)
        col = lax.broadcasted_iota(jnp.uint32, shape, 1)
        pair_idx = base + row * jnp.uint32(_LANES) + col
        bits1 = _sw_random_bits(pair_idx, seed, jnp.uint32(0x243F6A88))
        bits2 = _sw_random_bits(pair_idx, seed, jnp.uint32(0x85A308D3))

    u1 = jnp.float32(1.0) - _uniform_01(bits1)   # (0, 1]
    u2 = _uniform_01(bits2)                      # [0, 1)

    # Box-Muller; noise_factor folded into the radius (one mul per pair).
    r = jnp.float32(noise_factor) * jnp.sqrt(jnp.float32(-2.0) * jnp.log(u1))
    theta = jnp.float32(2.0 * math.pi) * u2
    n0 = r * jnp.cos(theta)   # ~ noise_factor * N(0, 1)
    n1 = r * jnp.sin(theta)   # ~ noise_factor * N(0, 1), independent of n0

    x0 = x_ref[:half, :].astype(jnp.float32)
    x1 = x_ref[half:, :].astype(jnp.float32)
    o_ref[:half, :] = (x0 + n0).astype(o_ref.dtype)
    o_ref[half:, :] = (x1 + n1).astype(o_ref.dtype)


def noise_transformation(spectrogram, seed=0, noise_factor=0.5):
    """out = spectrogram + noise_factor * N(0,1) noise, same shape/dtype."""
    orig_shape = spectrogram.shape
    dtype = spectrogram.dtype
    total = int(spectrogram.size)

    # Sublane granularity depends on dtype packing: f32 -> 8, bf16 -> 16, ...
    itemsize = jnp.dtype(dtype).itemsize
    sublane_mult = 8 * max(1, 4 // itemsize)
    pair_mult = 2 * sublane_mult  # keep both halves of a block tile-aligned

    rows = -(-total // _LANES)
    rows = _round_up(rows, pair_mult)
    block_rows = min(_round_up(_TARGET_BLOCK_ROWS, pair_mult), rows)
    rows = _round_up(rows, block_rows)
    padded_total = rows * _LANES

    x = spectrogram.reshape(-1)
    if padded_total != total:
        # TODO(synk): tail handling via masked stores would avoid this copy.
        x = jnp.pad(x, (0, padded_total - total))
    x2d = x.reshape(rows, _LANES)

    n_blocks = rows // block_rows
    seed_arr = jnp.array([seed], dtype=jnp.int32)

    use_hw_rng = jax.default_backend() == "tpu"
    kernel = functools.partial(
        _noise_kernel, block_rows=block_rows, noise_factor=noise_factor,
        use_hw_rng=use_hw_rng)

    out2d = pl.pallas_call(
        kernel,
        out_shape=jax.ShapeDtypeStruct((rows, _LANES), dtype),
        grid_spec=pltpu.PrefetchScalarGridSpec(
            num_scalar_prefetch=1,
            grid=(n_blocks,),
            in_specs=[
                pl.BlockSpec((block_rows, _LANES), lambda i, _s: (i, 0)),
            ],
            out_specs=pl.BlockSpec((block_rows, _LANES), lambda i, _s: (i, 0)),
        ),
        compiler_params=pltpu.CompilerParams(
            dimension_semantics=("parallel",),
            vmem_limit_bytes=32 * 1024 * 1024,
        ),
    )(seed_arr, x2d)

    out = out2d.reshape(-1)
    if padded_total != total:
        out = out[:total]
    return out.reshape(orig_shape)


if __name__ == "__main__":
    key = jax.random.PRNGKey(0)
    # Small spectrogram-like input: (batch, channels, freq, time) NCHW.
    x = jax.random.normal(key, (2, 4, 16, 16), dtype=jnp.float32)

    out = noise_transformation(x, seed=0, noise_factor=0.5)
    out = jax.block_until_ready(out)

    assert out.shape == x.shape, (out.shape, x.shape)
    assert out.dtype == x.dtype, (out.dtype, x.dtype)
    assert bool(jnp.all(jnp.isfinite(out)))
    # Sanity: residual (out - x) / 0.5 should look ~N(0,1).
    resid = (out - x) / 0.5
    assert abs(float(jnp.mean(resid))) < 0.2
    assert 0.7 < float(jnp.std(resid)) < 1.3

    print("KERNEL_OK")
</pallas_src>

<mosaic_0001>
module attributes {stable_mosaic.version = 11 : i64} {
  func.func @_noise_kernel(%arg0: i32, %arg1: memref<1xi32, #tpu.memory_space<smem>>, %arg2: memref<16x128xf32, #tpu.memory_space<vmem>>, %arg3: memref<16x128xf32, #tpu.memory_space<vmem>>) attributes {dimension_semantics = [#tpu.dimension_semantics<parallel>], iteration_bounds = array<i64: 1>, scalar_prefetch = 1 : i64, scratch_operands = 0 : i64, tpu.core_type = #tpu.core_type<tc>, window_params = [{transform_indices = @transform_0, window_bounds = array<i64: 16, 128>}, {transform_indices = @transform_1, window_bounds = array<i64: 16, 128>}]} {
    %c0 = arith.constant 0 : index
    %0 = memref.load %arg1[%c0] : memref<1xi32, #tpu.memory_space<smem>>
    %c1024_i32 = arith.constant 1024 : i32
    %1 = arith.muli %arg0, %c1024_i32 : i32
    %2 = tpu.iota {dimensions = array<i32: 0>} : vector<8x128xi32>
    %3 = tpu.iota {dimensions = array<i32: 1>} : vector<8x128xi32>
    %c128_i32 = arith.constant 128 : i32
    %4 = vector.broadcast %c128_i32 : i32 to vector<8x128xi32>
    %5 = arith.muli %2, %4 : vector<8x128xi32>
    %6 = vector.broadcast %1 : i32 to vector<8x128xi32>
    %7 = arith.addi %6, %5 : vector<8x128xi32>
    %8 = arith.addi %7, %3 : vector<8x128xi32>
    %c-1640531527_i32 = arith.constant -1640531527 : i32
    %9 = arith.muli %0, %c-1640531527_i32 : i32
    %10 = vector.broadcast %9 : i32 to vector<8x128xi32>
    %11 = arith.addi %8, %10 : vector<8x128xi32>
    %c608135816_i32 = arith.constant 608135816 : i32
    %12 = vector.broadcast %c608135816_i32 : i32 to vector<8x128xi32>
    %13 = arith.addi %11, %12 : vector<8x128xi32>
    %c16_i32 = arith.constant 16 : i32
    %14 = vector.broadcast %c16_i32 : i32 to vector<8x128xi32>
    %15 = arith.shrui %13, %14 : vector<8x128xi32>
    %16 = arith.xori %13, %15 : vector<8x128xi32>
    %c2146121005_i32 = arith.constant 2146121005 : i32
    %17 = vector.broadcast %c2146121005_i32 : i32 to vector<8x128xi32>
    %18 = arith.muli %16, %17 : vector<8x128xi32>
    %c15_i32 = arith.constant 15 : i32
    %19 = vector.broadcast %c15_i32 : i32 to vector<8x128xi32>
    %20 = arith.shrui %18, %19 : vector<8x128xi32>
    %21 = arith.xori %18, %20 : vector<8x128xi32>
    %c-2073254261_i32 = arith.constant -2073254261 : i32
    %22 = vector.broadcast %c-2073254261_i32 : i32 to vector<8x128xi32>
    %23 = arith.muli %21, %22 : vector<8x128xi32>
    %c16_i32_0 = arith.constant 16 : i32
    %24 = vector.broadcast %c16_i32_0 : i32 to vector<8x128xi32>
    %25 = arith.shrui %23, %24 : vector<8x128xi32>
    %26 = arith.xori %23, %25 : vector<8x128xi32>
    %c-1640531527_i32_1 = arith.constant -1640531527 : i32
    %27 = arith.muli %0, %c-1640531527_i32_1 : i32
    %28 = vector.broadcast %27 : i32 to vector<8x128xi32>
    %29 = arith.addi %8, %28 : vector<8x128xi32>
    %c-2052912941_i32 = arith.constant -2052912941 : i32
    %30 = vector.broadcast %c-2052912941_i32 : i32 to vector<8x128xi32>
    %31 = arith.addi %29, %30 : vector<8x128xi32>
    %c16_i32_2 = arith.constant 16 : i32
    %32 = vector.broadcast %c16_i32_2 : i32 to vector<8x128xi32>
    %33 = arith.shrui %31, %32 : vector<8x128xi32>
    %34 = arith.xori %31, %33 : vector<8x128xi32>
    %c2146121005_i32_3 = arith.constant 2146121005 : i32
    %35 = vector.broadcast %c2146121005_i32_3 : i32 to vector<8x128xi32>
    %36 = arith.muli %34, %35 : vector<8x128xi32>
    %c15_i32_4 = arith.constant 15 : i32
    %37 = vector.broadcast %c15_i32_4 : i32 to vector<8x128xi32>
    %38 = arith.shrui %36, %37 : vector<8x128xi32>
    %39 = arith.xori %36, %38 : vector<8x128xi32>
    %c-2073254261_i32_5 = arith.constant -2073254261 : i32
    %40 = vector.broadcast %c-2073254261_i32_5 : i32 to vector<8x128xi32>
    %41 = arith.muli %39, %40 : vector<8x128xi32>
    %c16_i32_6 = arith.constant 16 : i32
    %42 = vector.broadcast %c16_i32_6 : i32 to vector<8x128xi32>
    %43 = arith.shrui %41, %42 : vector<8x128xi32>
    %44 = arith.xori %41, %43 : vector<8x128xi32>
    %c9_i32 = arith.constant 9 : i32
    %45 = vector.broadcast %c9_i32 : i32 to vector<8x128xi32>
    %46 = arith.shrui %26, %45 : vector<8x128xi32>
    %c1065353216_i32 = arith.constant 1065353216 : i32
    %47 = vector.broadcast %c1065353216_i32 : i32 to vector<8x128xi32>
    %48 = arith.ori %46, %47 : vector<8x128xi32>
    %49 = tpu.bitcast %48 : vector<8x128xi32> -> vector<8x128xf32>
    %cst = arith.constant 1.000000e+00 : f32
    %50 = vector.broadcast %cst : f32 to vector<8x128xf32>
    %51 = arith.subf %49, %50 : vector<8x128xf32>
    %cst_7 = arith.constant 1.000000e+00 : f32
    %52 = vector.broadcast %cst_7 : f32 to vector<8x128xf32>
    %53 = arith.subf %52, %51 : vector<8x128xf32>
    %c9_i32_8 = arith.constant 9 : i32
    %54 = vector.broadcast %c9_i32_8 : i32 to vector<8x128xi32>
    %55 = arith.shrui %44, %54 : vector<8x128xi32>
    %c1065353216_i32_9 = arith.constant 1065353216 : i32
    %56 = vector.broadcast %c1065353216_i32_9 : i32 to vector<8x128xi32>
    %57 = arith.ori %55, %56 : vector<8x128xi32>
    %58 = tpu.bitcast %57 : vector<8x128xi32> -> vector<8x128xf32>
    %cst_10 = arith.constant 1.000000e+00 : f32
    %59 = vector.broadcast %cst_10 : f32 to vector<8x128xf32>
    %60 = arith.subf %58, %59 : vector<8x128xf32>
    %61 = math.log %53 : vector<8x128xf32>
    %cst_11 = arith.constant -2.000000e+00 : f32
    %62 = vector.broadcast %cst_11 : f32 to vector<8x128xf32>
    %63 = arith.mulf %62, %61 : vector<8x128xf32>
    %64 = math.sqrt %63 : vector<8x128xf32>
    %cst_12 = arith.constant 5.000000e-01 : f32
    %65 = vector.broadcast %cst_12 : f32 to vector<8x128xf32>
    %66 = arith.mulf %65, %64 : vector<8x128xf32>
    %cst_13 = arith.constant 6.28318548 : f32
    %67 = vector.broadcast %cst_13 : f32 to vector<8x128xf32>
    %68 = arith.mulf %67, %60 : vector<8x128xf32>
    %69 = math.cos %68 : vector<8x128xf32>
    %70 = arith.mulf %66, %69 : vector<8x128xf32>
    %71 = math.sin %68 : vector<8x128xf32>
    %72 = arith.mulf %66, %71 : vector<8x128xf32>
    %c0_14 = arith.constant 0 : index
    %c0_15 = arith.constant 0 : index
    %73 = vector.load %arg2[%c0_14, %c0_15] : memref<16x128xf32, #tpu.memory_space<vmem>>, vector<8x128xf32>
    %c8 = arith.constant 8 : index
    %c0_16 = arith.constant 0 : index
    %74 = vector.load %arg2[%c8, %c0_16] : memref<16x128xf32, #tpu.memory_space<vmem>>, vector<8x128xf32>
    %75 = arith.addf %73, %70 : vector<8x128xf32>
    %c0_17 = arith.constant 0 : index
    %c0_18 = arith.constant 0 : index
    %76 = vector.load %arg3[%c0_17, %c0_18] : memref<16x128xf32, #tpu.memory_space<vmem>>, vector<8x128xf32>
    tpu.vector_store %arg3[%c0_17, %c0_18], %75 {strides = array<i32>} : memref<16x128xf32, #tpu.memory_space<vmem>>, vector<8x128xf32>,
    %77 = arith.addf %74, %72 : vector<8x128xf32>
    %c8_19 = arith.constant 8 : index
    %c0_20 = arith.constant 0 : index
    %78 = vector.load %arg3[%c8_19, %c0_20] : memref<16x128xf32, #tpu.memory_space<vmem>>, vector<8x128xf32>
    tpu.vector_store %arg3[%c8_19, %c0_20], %77 {strides = array<i32>} : memref<16x128xf32, #tpu.memory_space<vmem>>, vector<8x128xf32>,
    return
  }
  func.func @transform_0(%arg0: i32, %arg1: memref<1xi32, #tpu.memory_space<smem>>) -> (i32, i32) {
    %c0_i32 = arith.constant 0 : i32
    %c0_i32_0 = arith.constant 0 : i32
    return %arg0, %c0_i32 : i32, i32
  }
  func.func @transform_1(%arg0: i32, %arg1: memref<1xi32, #tpu.memory_space<smem>>) -> (i32, i32) {
    %c0_i32 = arith.constant 0 : i32
    %c0_i32_0 = arith.constant 0 : i32
    return %arg0, %c0_i32 : i32, i32
  }
}

</mosaic_0001>

<llo_original>
// kernel: tpu_custom_call.1
$region0: #{tpu_custom_call.1}
  #allocation0 [shape = 'u32[]', space=smem, size = 0x4, offset = 0x4, fixed_abs, tag = 'smem constant byte address 0x4 - core index']
  #allocation1 [shape = 'u32[144,128]{1,0:T(1,128)}', space=vmem, size = 0x12000, scoped, tag = 'internal scratch']
  #allocation2 [shape = 's32[1]{0}', space=sflag, size = 0x4, scoped, tag = 'scoped memory for tpu_custom_call.1']
  #allocation3 [shape = 's32[1]{0:T(128)S(6)}', space=smem, size = 0x200, scoped, tag = 'prefetched SMEM operand 0']
  %s0 = inlined_call_operand.<no memory space> [shape: s32[1], index: 0, kind: input, shape index: {}]
  %s1 = inlined_call_operand.hbm [shape: f32[16,128], index: 1, kind: input, shape index: {}]
  %s2 = inlined_call_operand.hbm [shape: f32[16,128], index: 2, kind: output, shape index: {}]
  %s3 = sld [smem:[#allocation0]]
  $region18: #{tpu_custom_call.1} parent=0
    _
  %s5 = ssub.s32 1, %s3
  %s6 = scalar_select 0, %s5, %s3
  %7 = sst [smem:[#allocation3]] %s0
  $region1: #{tpu_custom_call.1} parent=0
    #allocation4 [shape = 'u8[8192]{0}', space=vmem, size = 0x2000, scoped, tag = 'input window, operand 1, single buffered']
    #allocation5 [shape = 's32[1]{0}', space=sflag, size = 0x4, scoped, tag = 'scoped memory for tpu_custom_call.1']
    #allocation6 [shape = 's32[1]{0}', space=sflag, size = 0x4, scoped, tag = 'scoped memory for tpu_custom_call.1']
    #allocation7 [shape = 'u8[8192]{0}', space=vmem, size = 0x2000, scoped, tag = 'output window, operand 0, single buffered']
    %8 = vsyncpa [#allocation5], 0
    %9 = vsyncpa [#allocation6], 0
    // Predicated region
    $region2: #{tpu_custom_call.1} parent=1 // pred_check
      _
    $region3: #{tpu_custom_call.1} parent=1 // pred_check_branch
      %11 = sbr.rel (0) target = $region5
    $region4: #{tpu_custom_call.1} parent=1 // pred_region
      %s13 = ssub.s32 256, 256
      %14 = vsyncadd [#allocation5], %s13
      %s15 = sshll.u32 [#allocation4], 4
      %s16 = int_to_ptr.vmem [resolvable:$true] %s15
      %21 = dma.hbm_to_vmem [thread:$0]  %s1, 256, %s16, [#allocation5], 128, 128, 8
    $region5: #{tpu_custom_call.1} parent=1 // pred_fallthru
      _
    // Predicated region
    $region6: #{tpu_custom_call.1} parent=1 // pred_check
      _
    $region7: #{tpu_custom_call.1} parent=1 // pred_check_branch
      %23 = sbr.rel (0) target = $region9
    $region8: #{tpu_custom_call.1} parent=1 // pred_region
      %24 = dma.done [#allocation5], 256
    $region9: #{tpu_custom_call.1} parent=1 // pred_fallthru
      _
    %s25 = sld [smem:[#allocation3]]
    %s26 = smul.u32 0, 1024
    %v27 = vlaneseq
    %v28 = vshrl.u32 %v27, 7
    %v29 = vlaneseq
    %v30 = vand.u32 %v29, 127
    %v31 = vmul.u32 %v28, 128
    %v32 = vstv %s26
    %v33 = vadd.s32 %v32, %v31
    %v34 = vadd.s32 %v33, %v30
    %s35 = smul.u32 %s25, 2654435769
    %v36 = vstv %s35
    %v37 = vadd.s32 %v34, %v36
    %v38 = vadd.s32 %v37, 608135816
    %v39 = vshrl.u32 %v38, 16
    %v40 = vxor.u32 %v38, %v39
    %v41 = vmul.u32 %v40, 2146121005
    %v42 = vshrl.u32 %v41, 15
    %v43 = vxor.u32 %v41, %v42
    %v44 = vmul.u32 %v43, 2221713035
    %v45 = vshrl.u32 %v44, 16
    %v46 = vxor.u32 %v44, %v45
    %v47 = vadd.s32 %v37, 2242054355
    %v48 = vshrl.u32 %v47, 16
    %v49 = vxor.u32 %v47, %v48
    %v50 = vmul.u32 %v49, 2146121005
    %v51 = vshrl.u32 %v50, 15
    %v52 = vxor.u32 %v50, %v51
    %v53 = vmul.u32 %v52, 2221713035
    %v54 = vshrl.u32 %v53, 16
    %v55 = vxor.u32 %v53, %v54
    %v56 = vshrl.u32 %v46, 9
    %v57 = vor.u32 %v56, 1065353216
    %v59 = vsub.f32 %v57, 1.0
    %v60 = vsub.f32 1.0, %v59
    %v61 = vshrl.u32 %v55, 9
    %v62 = vor.u32 %v61, 1065353216
    %v64 = vsub.f32 %v62, 1.0
    %v65 = vlog2.pop %v60
    %v66 = vmul.f32 %v65, 0.6931472
    %v67 = vmul.f32 %v66, -2.0
    %v68 = vrsqrt.pop %v67
    %v69 = vmul.f32 %v67, %v68
    %vm70 = vcmp.eq.f32.partialorder %v67, inf
    %v71 = vsel %vm70, %v67, %v69
    %vm72 = vcmp.eq.f32.partialorder %v67, 0.0
    %v73 = vand.u32 %v67, 2147483648
    %v74 = vsel %vm72, %v73, %v71
    %v75 = vmul.f32 %v74, 0.5
    %v76 = vmul.f32 %v64, 6.2831855
    %v77 = vand.u32 2147483647, %v76
    %vm78 = vcmp.le.f32.partialorder %v77, 0.7853982
    %vm79 = vcmp.lt.s32.totalorder %v76, 0
    %v80 = vand.u32 %v76, 2139095040
    %v81 = vshrl.u32 %v80, 23
    %v82 = vsub.s32 %v81, 127
    %v83 = vand.u32 2147483647, %v76
    %v84 = vand.u32 %v83, 8388607
    %v85 = vor.u32 %v84, 8388608
    %v86 = vsub.s32 0, %v85
    %v87 = vadd.s32 %v82, 1
    %vm88 = vcmp.gt.s32.totalorder %v87, 0
    %v89 = vsel %vm88, %v87, 0
    %v90 = vshrl.u32 %v89, 5
    %v91 = vand.u32 %v89, 31
    %v92 = vsub.s32 32, %v91
    %v93 = vshrl.u32 683565275, %v92
    %v94 = vshll.u32 683565275, %v91
    %v95 = vshrl.u32 2475754826, %v92
    %v96 = vor.u32 %v94, %v95
    %v97 = vshll.u32 2475754826, %v91
    %v98 = vshrl.u32 2131351028, %v92
    %v99 = vor.u32 %v97, %v98
    %v100 = vshll.u32 2131351028, %v91
    %v101 = vshrl.u32 2102212464, %v92
    %v102 = vor.u32 %v100, %v101
    %v103 = vshll.u32 2102212464, %v91
    %v104 = vshrl.u32 920167782, %v92
    %v105 = vor.u32 %v103, %v104
    %v106 = vshll.u32 920167782, %v91
    %v107 = vshrl.u32 1326507024, %v92
    %v108 = vor.u32 %v106, %v107
    %vm109 = vcmp.lt.s32.totalorder %v90, 1
    %vm110 = vcmp.lt.s32.totalorder %v90, 2
    %vm111 = vcmp.lt.s32.totalorder %v90, 3
    %vm112 = vcmp.lt.s32.totalorder %v90, 4
    %v113 = vsel %vm109, %v93, %v96
    %v114 = vsel %vm112, %v102, 2102212464
    %v115 = vsel %vm111, %v99, %v114
    %v116 = vsel %vm110, %v113, %v115
    %v117 = vsel %vm109, %v96, %v99
    %v118 = vsel %vm112, %v105, 920167782
    %v119 = vsel %vm111, %v102, %v118
    %v120 = vsel %vm110, %v117, %v119
    %v121 = vsel %vm109, %v99, %v102
    %v122 = vsel %vm112, %v108, 1326507024
    %v123 = vsel %vm111, %v105, %v122
    %v124 = vsel %vm110, %v121, %v123
    %v125 = vshll.u32 %v85, 8
    %v126 = vmul.u32.u64.compose %v125, %v124
    %v127 = vextract.low.u32 %v126
    %v128 = vextract.high.u32 %v126
    %v129 = vmul.u32.u64.compose %v125, %v120
    %v130 = vextract.low.u32 %v129
    %v131 = vextract.high.u32 %v129
    %v132 = vmul.u32 %v125, %v116
    %v133 = vadd.s32 %v128, %v130
    %vm134 = vc.u32 %v128, %v130
    %v135 = vadd.s32 %v131, 1
    %v136 = vsel %vm134, %v135, %v131
    %v137 = vadd.s32 %v132, %v136
    %v138 = vadd.s32 %v137, 536870912
    %v139 = vshrl.u32 %v138, 30
    %v140 = vshll.u32 %v139, 30
    %v141 = vsub.s32 %v137, %v140
    %vm142 = vcmp.lt.s32.totalorder %v141, 0
    %v143 = vsub.s32 0, %v141
    %v144 = vsel %vm142, %v143, %v141
    %v145 = vclz %v144
    %v146 = vsub.s32 %v145, 2
    %vm147 = vcmp.gt.s32.totalorder 0, %v146
    %v148 = vsel %vm147, 0, %v146
    %v149 = vsub.s32 32, %v148
    %v150 = vshll.u32 %v141, %v148
    %v151 = vshrl.u32 %v133, %v149
    %v152 = vor.u32 %v150, %v151
    %v153 = vsub.s32 4294967266, %v148
    %v154 = vadd.s32 %v153, 127
    %v155 = vshll.u32 %v154, 23
    %v156 = vor.u32 4788187, %v155
    %v157 = vand.u32 2147483647, %v156
    %v159 = vcvt.s32.f32 %v152
    %v160 = vmul.f32 %v159, %v157
    %v161 = vxor.u32 %v160, 2147483648
    %v162 = vsel %vm79, %v161, %v160
    %v163 = vsub.s32 4, %v139
    %v164 = vsel %vm79, %v163, %v139
    %v165 = vsel %vm78, %v76, %v162
    %v166 = vsel %vm78, 0, %v164
    %v167 = vcosq.f32.pop %v165
    %v168 = vsinq.f32.pop %v165
    %vm169 = vweird.f32 %v76
    %v170 = vand.u32 %v166, 3
    %vm171 = vcmp.lt.s32.totalorder %v170, 2
    %vm172 = vcmp.eq.s32.totalorder %v170, 0
    %v173 = vxor.u32 %v168, 2147483648
    %v174 = vsel %vm172, %v167, %v173
    %vm175 = vcmp.eq.s32.totalorder %v170, 2
    %v176 = vxor.u32 %v167, 2147483648
    %v177 = vsel %vm175, %v176, %v168
    %v178 = vsel %vm171, %v174, %v177
    %v179 = vsel %vm169, nan, %v178
    %v180 = vmul.f32 %v75, %v179
    %v181 = vand.u32 2147483647, %v76
    %vm182 = vcmp.le.f32.partialorder %v181, 0.7853982
    %vm183 = vcmp.lt.s32.totalorder %v76, 0
    %v184 = vand.u32 %v76, 2139095040
    %v185 = vshrl.u32 %v184, 23
    %v186 = vsub.s32 %v185, 127
    %v187 = vand.u32 2147483647, %v76
    %v188 = vand.u32 %v187, 8388607
    %v189 = vor.u32 %v188, 8388608
    %v190 = vsub.s32 0, %v189
    %v191 = vadd.s32 %v186, 1
    %vm192 = vcmp.gt.s32.totalorder %v191, 0
    %v193 = vsel %vm192, %v191, 0
    %v194 = vshrl.u32 %v193, 5
    %v195 = vand.u32 %v193, 31
    %v196 = vsub.s32 32, %v195
    %v197 = vshrl.u32 683565275, %v196
    %v198 = vshll.u32 683565275, %v195
    %v199 = vshrl.u32 2475754826, %v196
    %v200 = vor.u32 %v198, %v199
    %v201 = vshll.u32 2475754826, %v195
    %v202 = vshrl.u32 2131351028, %v196
    %v203 = vor.u32 %v201, %v202
    %v204 = vshll.u32 2131351028, %v195
    %v205 = vshrl.u32 2102212464, %v196
    %v206 = vor.u32 %v204, %v205
    %v207 = vshll.u32 2102212464, %v195
    %v208 = vshrl.u32 920167782, %v196
    %v209 = vor.u32 %v207, %v208
    %v210 = vshll.u32 920167782, %v195
    %v211 = vshrl.u32 1326507024, %v196
    %v212 = vor.u32 %v210, %v211
    %vm213 = vcmp.lt.s32.totalorder %v194, 1
    %vm214 = vcmp.lt.s32.totalorder %v194, 2
    %vm215 = vcmp.lt.s32.totalorder %v194, 3
    %vm216 = vcmp.lt.s32.totalorder %v194, 4
    %v217 = vsel %vm213, %v197, %v200
    %v218 = vsel %vm216, %v206, 2102212464
    %v219 = vsel %vm215, %v203, %v218
    %v220 = vsel %vm214, %v217, %v219
    %v221 = vsel %vm213, %v200, %v203
    %v222 = vsel %vm216, %v209, 920167782
    %v223 = vsel %vm215, %v206, %v222
    %v224 = vsel %vm214, %v221, %v223
    %v225 = vsel %vm213, %v203, %v206
    %v226 = vsel %vm216, %v212, 1326507024
    %v227 = vsel %vm215, %v209, %v226
    %v228 = vsel %vm214, %v225, %v227
    %v229 = vshll.u32 %v189, 8
    %v230 = vmul.u32.u64.compose %v229, %v228
    %v231 = vextract.low.u32 %v230
    %v232 = vextract.high.u32 %v230
    %v233 = vmul.u32.u64.compose %v229, %v224
    %v234 = vextract.low.u32 %v233
    %v235 = vextract.high.u32 %v233
    %v236 = vmul.u32 %v229, %v220
    %v237 = vadd.s32 %v232, %v234
    %vm238 = vc.u32 %v232, %v234
    %v239 = vadd.s32 %v235, 1
    %v240 = vsel %vm238, %v239, %v235
    %v241 = vadd.s32 %v236, %v240
    %v242 = vadd.s32 %v241, 536870912
    %v243 = vshrl.u32 %v242, 30
    %v244 = vshll.u32 %v243, 30
    %v245 = vsub.s32 %v241, %v244
    %vm246 = vcmp.lt.s32.totalorder %v245, 0
    %v247 = vsub.s32 0, %v245
    %v248 = vsel %vm246, %v247, %v245
    %v249 = vclz %v248
    %v250 = vsub.s32 %v249, 2
    %vm251 = vcmp.gt.s32.totalorder 0, %v250
    %v252 = vsel %vm251, 0, %v250
    %v253 = vsub.s32 32, %v252
    %v254 = vshll.u32 %v245, %v252
    %v255 = vshrl.u32 %v237, %v253
    %v256 = vor.u32 %v254, %v255
    %v257 = vsub.s32 4294967266, %v252
    %v258 = vadd.s32 %v257, 127
    %v259 = vshll.u32 %v258, 23
    %v260 = vor.u32 4788187, %v259
    %v261 = vand.u32 2147483647, %v260
    %v263 = vcvt.s32.f32 %v256
    %v264 = vmul.f32 %v263, %v261
    %v265 = vxor.u32 %v264, 2147483648
    %v266 = vsel %vm183, %v265, %v264
    %v267 = vsub.s32 4, %v243
    %v268 = vsel %vm183, %v267, %v243
    %v269 = vsel %vm182, %v76, %v266
    %v270 = vsel %vm182, 0, %v268
    %v271 = vcosq.f32.pop %v269
    %v272 = vsinq.f32.pop %v269
    %vm273 = vweird.f32 %v76
    %v274 = vadd.s32 %v270, 3
    %v275 = vand.u32 %v274, 3
    %vm276 = vcmp.lt.s32.totalorder %v275, 2
    %vm277 = vcmp.eq.s32.totalorder %v275, 0
    %v278 = vxor.u32 %v272, 2147483648
    %v279 = vsel %vm277, %v271, %v278
    %vm280 = vcmp.eq.s32.totalorder %v275, 2
    %v281 = vxor.u32 %v271, 2147483648
    %v282 = vsel %vm280, %v281, %v272
    %v283 = vsel %vm276, %v279, %v282
    %v284 = vsel %vm273, nan, %v283
    %v285 = vmul.f32 %v75, %v284
    %v286 = vld [vmem:[#allocation4] sm:$0xff]
    %v287 = vld [vmem:[#allocation4 + $0x8] sm:$0xff]
    %v288 = vadd.f32 %v286, %v180
    %289 = vst [vmem:[#allocation7] sm:$0xff] %v288
    %v290 = vadd.f32 %v287, %v285
    %291 = vst [vmem:[#allocation7 + $0x8] sm:$0xff] %v290
    // Predicated region
    $region10: #{tpu_custom_call.1} parent=1 // pred_check
      _
    $region11: #{tpu_custom_call.1} parent=1 // pred_check_branch
      %293 = sbr.rel (0) target = $region13
    $region12: #{tpu_custom_call.1} parent=1 // pred_region
      %s295 = ssub.s32 256, 256
      %296 = vsyncadd [#allocation6], %s295
      %s297 = sshll.u32 [#allocation7], 4
      %s298 = int_to_ptr.vmem [resolvable:$true] %s297
      %303 = dma.vmem_to_hbm [thread:$0]  %s298, 256, %s2, [#allocation6], 128, 128, 8
    $region13: #{tpu_custom_call.1} parent=1 // pred_fallthru
      _
    // Predicated region
    $region14: #{tpu_custom_call.1} parent=1 // pred_check
      _
    $region15: #{tpu_custom_call.1} parent=1 // pred_check_branch
      %305 = sbr.rel (0) target = $region17
    $region16: #{tpu_custom_call.1} parent=1 // pred_region
      %306 = dma.done [#allocation6], 256
    $region17: #{tpu_custom_call.1} parent=1 // pred_fallthru
      _
    %307 = vsyncpa [#allocation5], 1
    %308 = vsyncpa [#allocation6], 1

</llo_original>
